<compile_context>
chip_gen: v7x
topology: tpu7x:2x2x1
jax: 0.10.0
libtpu: 0.0.40
codegen_flags: <defaults>
</compile_context>

<pallas_src>
import functools

import jax
import jax.numpy as jnp
from jax.experimental import pallas as pl
from jax.experimental.pallas import tpu as pltpu

SIZE = 64       # in_features  (from x1 = torch.randn(16, 64))
NEW_SIZE = 32   # out_features (module's `new_size` unspecified; synthetic choice)
LANE = 128      # TPU vreg lane width
SUBLANE = 8     # TPU vreg sublane height


def _linear_bias_fast_kernel(x_ref, w_ref, b_ref, o_ref):
    """Single-K-block path: no accumulator round-trip, no scf.if branches."""
    o_ref[...] = (
        jnp.dot(x_ref[...], w_ref[...], preferred_element_type=jnp.float32)
        + b_ref[...].astype(jnp.float32)
    ).astype(o_ref.dtype)


def _linear_bias_acc_kernel(x_ref, w_ref, b_ref, o_ref, acc_ref):
    """Multi-K-block path: f32 accumulator seeded with the (+1-folded) bias."""
    @pl.when(pl.program_id(2) == 0)
    def _init():
        acc_ref[...] = jnp.broadcast_to(
            b_ref[...].astype(jnp.float32), acc_ref.shape)

    acc_ref[...] += jnp.dot(
        x_ref[...], w_ref[...], preferred_element_type=jnp.float32)

    @pl.when(pl.program_id(2) == pl.num_programs(2) - 1)
    def _finalize():
        o_ref[...] = acc_ref[...].astype(o_ref.dtype)


def _pick_tile(dim: int, pref: int, align: int) -> int:
    """Bounded, alignment-friendly tile size (never exceeds pref for big dims)."""
    if dim <= pref:
        return dim  # full-extent block: always legal and already <= pref
    # Largest multiple of `align` that is <= pref and divides dim exactly.
    t = (pref // align) * align
    while t >= align and dim % t != 0:
        t -= align
    if t >= align:
        return t
    # No aligned divisor <= pref: fixed aligned tile; caller uses a cdiv grid
    # on that axis (Pallas masks the remainder block on the output axes).
    return (pref // align) * align


@functools.partial(jax.jit, static_argnames=("tm", "tn", "tk"))
def linear_plus_one(x, w_t_pad, b_pad, *, tm=None, tn=None, tk=None):
    """x: (M, K), w_t_pad: (K, Np), b_pad: (1, Np) f32 -> (M, Np) f32.

    b_pad must already include the '+1' fold; Np must be a multiple of 128
    (lane-dense) — padding is done once by prepare_params.
    """
    M, K = x.shape
    Kw, Np = w_t_pad.shape
    assert Kw == K and b_pad.shape == (1, Np)

    tm = tm or _pick_tile(M, 256, SUBLANE)
    tn = tn or _pick_tile(Np, 256, LANE)
    tk = tk or _pick_tile(K, 512, LANE)
    if K % tk != 0:
        # TODO(synk): pad K to a multiple of 128 at prepare_params time for
        # pathological K; OOB K reads would otherwise corrupt valid outputs.
        raise ValueError(f"K ({K}) must be divisible by the K tile ({tk})")

    grid = (pl.cdiv(M, tm), pl.cdiv(Np, tn), K // tk)

    in_isz = jnp.dtype(x.dtype).itemsize
    f32_isz = jnp.dtype(b_pad.dtype).itemsize
    cost = pl.CostEstimate(
        flops=2 * M * K * Np,
        transcendentals=0,
        bytes_accessed=(x.size + w_t_pad.size) * in_isz
        + (b_pad.size + M * Np) * f32_isz,
    )

    x_spec = pl.BlockSpec((tm, tk), lambda i, j, k: (i, k))
    if grid[2] >= 3:
        # v5e: keep the K-axis weight stream DMA hidden with deeper buffering.
        w_spec = pl.BlockSpec((tk, tn), lambda i, j, k: (k, j),
                              pipeline_mode=pl.Buffered(3))
    else:
        w_spec = pl.BlockSpec((tk, tn), lambda i, j, k: (k, j))
    b_spec = pl.BlockSpec((1, tn), lambda i, j, k: (0, j))
    o_spec = pl.BlockSpec((tm, tn), lambda i, j, k: (i, j))

    if grid[2] == 1:
        kernel = _linear_bias_fast_kernel
        scratch = []
    else:
        kernel = _linear_bias_acc_kernel
        scratch = [pltpu.VMEM((tm, tn), jnp.float32)]

    return pl.pallas_call(
        kernel,
        out_shape=jax.ShapeDtypeStruct((M, Np), b_pad.dtype),
        grid_spec=pltpu.PrefetchScalarGridSpec(
            num_scalar_prefetch=0,
            grid=grid,
            in_specs=[x_spec, w_spec, b_spec],
            out_specs=o_spec,
            scratch_shapes=scratch,
        ),
        compiler_params=pltpu.CompilerParams(
            dimension_semantics=("parallel", "parallel", "arbitrary"),
        ),
        cost_estimate=cost,
    )(x, w_t_pad, b_pad)


def prepare_params(weight, bias, compute_dtype=jnp.float32):
    """One-time parameter packing (outside the hot path).

    - Transpose weight (out,in) -> (in,out) so the kernel does x @ W.
    - Pad N up to a multiple of 128 so kernel stores are full-width vst.
    - Fold the '+1' constant into the bias (kept f32 for accumulation).
    - Optionally cast the packed weight to bf16 (v6e/v7x MXU-native); the
      caller should cast x to the same dtype. Accumulation stays f32.
    """
    out_f, in_f = weight.shape
    n_pad = ((out_f + LANE - 1) // LANE) * LANE
    w_t_pad = jnp.zeros((in_f, n_pad), compute_dtype)
    w_t_pad = w_t_pad.at[:, :out_f].set(weight.T.astype(compute_dtype))
    b_pad = jnp.zeros((1, n_pad), jnp.float32)
    b_pad = b_pad.at[0, :out_f].set(bias.astype(jnp.float32) + 1.0)
    return w_t_pad, b_pad, n_pad


if __name__ == "__main__":
    key = jax.random.PRNGKey(0)
    kx, kw, kb = jax.random.split(key, 3)

    # Input matching the PyTorch script: x1 = torch.randn(16, 64)
    x1 = jax.random.normal(kx, (16, SIZE), dtype=jnp.float32)

    # Deterministic parameter init (PyTorch Linear stores weight as (out, in)).
    bound = 1.0 / (SIZE ** 0.5)
    weight = jax.random.uniform(kw, (NEW_SIZE, SIZE), dtype=jnp.float32,
                                minval=-bound, maxval=bound)
    bias = jax.random.uniform(kb, (NEW_SIZE,), dtype=jnp.float32,
                              minval=-bound, maxval=bound)

    # One-time packing: transpose, pad N -> 128 (lane-dense), fold +1 into bias.
    w_t_pad, b_pad, n_pad = prepare_params(weight, bias)

    out_pad = linear_plus_one(x1, w_t_pad, b_pad)
    jax.block_until_ready(out_pad)
    out = out_pad[:, :NEW_SIZE]

    # Reference check (plain JAX == PyTorch semantics: x @ W^T + b + 1)
    ref = x1 @ weight.T + bias + 1.0
    assert out.shape == (16, NEW_SIZE)
    assert jnp.allclose(out, ref, atol=1e-5, rtol=1e-5), "mismatch vs reference"
    # Padded output columns: zero weights + zero bias -> exactly zero.
    assert jnp.all(out_pad[:, NEW_SIZE:] == 0.0)

    print("KERNEL_OK")
</pallas_src>

<mosaic_0001>
module attributes {stable_mosaic.version = 11 : i64} {
  func.func @_linear_bias_fast_kernel(%arg0: i32, %arg1: i32, %arg2: i32, %arg3: memref<16x64xf32, #tpu.memory_space<vmem>>, %arg4: memref<64x128xf32, #tpu.memory_space<vmem>>, %arg5: memref<1x128xf32, #tpu.memory_space<vmem>>, %arg6: memref<16x128xf32, #tpu.memory_space<vmem>>) attributes {dimension_semantics = [#tpu.dimension_semantics<parallel>, #tpu.dimension_semantics<parallel>, #tpu.dimension_semantics<arbitrary>], iteration_bounds = array<i64: 1, 1, 1>, scalar_prefetch = 0 : i64, scratch_operands = 0 : i64, tpu.core_type = #tpu.core_type<tc>, window_params = [{transform_indices = @transform_0, window_bounds = array<i64: 16, 64>}, {transform_indices = @transform_1, window_bounds = array<i64: 64, 128>}, {transform_indices = @transform_2, window_bounds = array<i64: 1, 128>}, {transform_indices = @transform_3, window_bounds = array<i64: 16, 128>}]} {
    %c0 = arith.constant 0 : index
    %c0_0 = arith.constant 0 : index
    %0 = vector.load %arg3[%c0, %c0_0] : memref<16x64xf32, #tpu.memory_space<vmem>>, vector<16x64xf32>
    %c0_1 = arith.constant 0 : index
    %c0_2 = arith.constant 0 : index
    %1 = vector.load %arg4[%c0_1, %c0_2] : memref<64x128xf32, #tpu.memory_space<vmem>>, vector<64x128xf32>
    %cst = arith.constant dense<0.000000e+00> : vector<16x128xf32>
    %2 = tpu.matmul %0, %1, %cst {dimension_numbers = #tpu.dot_dimension_numbers<[1], [0], [0], [1], [0, 0, 1, 1], [], []>} : vector<16x64xf32>, vector<64x128xf32>, vector<16x128xf32> -> vector<16x128xf32>
    %c0_3 = arith.constant 0 : index
    %c0_4 = arith.constant 0 : index
    %3 = vector.load %arg5[%c0_3, %c0_4] : memref<1x128xf32, #tpu.memory_space<vmem>>, vector<1x128xf32>
    %4 = vector.broadcast %3 : vector<1x128xf32> to vector<16x128xf32>
    %5 = arith.addf %2, %4 : vector<16x128xf32>
    %c0_5 = arith.constant 0 : index
    %c0_6 = arith.constant 0 : index
    %6 = vector.load %arg6[%c0_5, %c0_6] : memref<16x128xf32, #tpu.memory_space<vmem>>, vector<16x128xf32>
    tpu.vector_store %arg6[%c0_5, %c0_6], %5 {strides = array<i32>} : memref<16x128xf32, #tpu.memory_space<vmem>>, vector<16x128xf32>,
    return
  }
  func.func @transform_0(%arg0: i32, %arg1: i32, %arg2: i32) -> (i32, i32) {
    %c0_i32 = arith.constant 0 : i32
    return %arg0, %arg2 : i32, i32
  }
  func.func @transform_1(%arg0: i32, %arg1: i32, %arg2: i32) -> (i32, i32) {
    %c0_i32 = arith.constant 0 : i32
    return %arg2, %arg1 : i32, i32
  }
  func.func @transform_2(%arg0: i32, %arg1: i32, %arg2: i32) -> (i32, i32) {
    %c0_i32 = arith.constant 0 : i32
    %c0_i32_0 = arith.constant 0 : i32
    return %c0_i32, %arg1 : i32, i32
  }
  func.func @transform_3(%arg0: i32, %arg1: i32, %arg2: i32) -> (i32, i32) {
    %c0_i32 = arith.constant 0 : i32
    return %arg0, %arg1 : i32, i32
  }
}

</mosaic_0001>

<llo_original>
// kernel: linear_plus_one.1
$region0: #{linear_plus_one.1}
  #allocation0 [shape = 'u32[]', space=smem, size = 0x4, offset = 0x4, fixed_abs, tag = 'smem constant byte address 0x4 - core index']
  #allocation1 [shape = 'u32[144,128]{1,0:T(1,128)}', space=vmem, size = 0x12000, scoped, tag = 'internal scratch']
  %s0 = inlined_call_operand.hbm [shape: f32[16,64], index: 0, kind: input, shape index: {}]
  %s1 = inlined_call_operand.hbm [shape: f32[64,128], index: 1, kind: input, shape index: {}]
  %s2 = inlined_call_operand.vmem [shape: f32[1,128], index: 2, kind: input, shape index: {}]
  %s3 = inlined_call_operand.hbm [shape: f32[16,128], index: 3, kind: output, shape index: {}]
  %s4 = sld [smem:[#allocation0]]
  $region30: #{linear_plus_one.1} parent=0
    _
  %s6 = ssub.s32 1, %s4
  %s7 = scalar_select 0, %s6, %s4
  $region1: #{linear_plus_one.1} parent=0
    #allocation2 [shape = 'u8[8192]{0}', space=vmem, size = 0x2000, scoped, tag = 'input window, operand 0, single buffered']
    #allocation3 [shape = 's32[1]{0}', space=sflag, size = 0x4, scoped, tag = 'scoped memory for linear_plus_one.1']
    #allocation4 [shape = 's32[1]{0}', space=sflag, size = 0x4, scoped, tag = 'scoped memory for linear_plus_one.1']
    #allocation5 [shape = 'u8[32768]{0}', space=vmem, size = 0x8000, scoped, tag = 'input window, operand 1, single buffered']
    #allocation6 [shape = 's32[1]{0}', space=sflag, size = 0x4, scoped, tag = 'scoped memory for linear_plus_one.1']
    #allocation7 [shape = 'u8[8192]{0}', space=vmem, size = 0x2000, scoped, tag = 'output window, operand 0, single buffered']
    %8 = vsyncpa [#allocation3], 0
    %9 = vsyncpa [#allocation6], 0
    %10 = vsyncpa [#allocation4], 0
    // Predicated region
    $region2: #{linear_plus_one.1} parent=1 // pred_check
      _
    $region3: #{linear_plus_one.1} parent=1 // pred_check_branch
      %12 = sbr.rel (0) target = $region5
    $region4: #{linear_plus_one.1} parent=1 // pred_region
      %s14 = ssub.s32 256, 256
      %15 = vsyncadd [#allocation3], %s14
      %s16 = sshll.u32 [#allocation2], 4
      %s17 = int_to_ptr.vmem [resolvable:$true] %s16
      %22 = dma.hbm_to_vmem [thread:$0]  %s0, 256, %s17, [#allocation3], 128, 128, 8
    $region5: #{linear_plus_one.1} parent=1 // pred_fallthru
      _
    // Predicated region
    $region6: #{linear_plus_one.1} parent=1 // pred_check
      _
    $region7: #{linear_plus_one.1} parent=1 // pred_check_branch
      %24 = sbr.rel (0) target = $region9
    $region8: #{linear_plus_one.1} parent=1 // pred_region
      %s26 = ssub.s32 1024, 1024
      %27 = vsyncadd [#allocation6], %s26
      %s28 = sshll.u32 [#allocation5], 4
      %s29 = int_to_ptr.vmem [resolvable:$true] %s28
      %34 = dma.hbm_to_vmem [thread:$0]  %s1, 1024, %s29, [#allocation6], 128, 128, 8
    $region9: #{linear_plus_one.1} parent=1 // pred_fallthru
      _
    // Predicated region
    $region10: #{linear_plus_one.1} parent=1 // pred_check
      _
    $region11: #{linear_plus_one.1} parent=1 // pred_check_branch
      %36 = sbr.rel (0) target = $region13
    $region12: #{linear_plus_one.1} parent=1 // pred_region
      _
    $region13: #{linear_plus_one.1} parent=1 // pred_fallthru
      _
    // Predicated region
    $region14: #{linear_plus_one.1} parent=1 // pred_check
      _
    $region15: #{linear_plus_one.1} parent=1 // pred_check_branch
      %38 = sbr.rel (0) target = $region17
    $region16: #{linear_plus_one.1} parent=1 // pred_region
      %39 = dma.done [#allocation3], 256
    $region17: #{linear_plus_one.1} parent=1 // pred_fallthru
      _
    // Predicated region
    $region18: #{linear_plus_one.1} parent=1 // pred_check
      _
    $region19: #{linear_plus_one.1} parent=1 // pred_check_branch
      %41 = sbr.rel (0) target = $region21
    $region20: #{linear_plus_one.1} parent=1 // pred_region
      %42 = dma.done [#allocation6], 1024
    $region21: #{linear_plus_one.1} parent=1 // pred_fallthru
      _
    %v43 = vld [vmem:[#allocation2] sm:$0xff]
    %v44 = vld [vmem:[#allocation2 + $0x8] sm:$0xff]
    %v45 = vld [vmem:[#allocation5] sm:$0xff]
    %v46 = vld [vmem:[#allocation5 + $0x8] sm:$0xff]
    %v47 = vld [vmem:[#allocation5 + $0x10] sm:$0xff]
    %v48 = vld [vmem:[#allocation5 + $0x18] sm:$0xff]
    %v49 = vld [vmem:[#allocation5 + $0x20] sm:$0xff]
    %v50 = vld [vmem:[#allocation5 + $0x28] sm:$0xff]
    %v51 = vld [vmem:[#allocation5 + $0x30] sm:$0xff]
    %v52 = vld [vmem:[#allocation5 + $0x38] sm:$0xff]
    %v53 = vld [vmem:[%s2] sm:$0x1]
    %v55 = vlaneseq
    %v56 = vshrl.u32 %v55, 7
    %v57 = vsub.s32 0, %v56
    %v58 = vrot.slane %v53, %v57
    %vm60 = vcmask 523264
    %v62 = vsel %vm60, %v43, 0
    %v65 = vsel %vm60, %v44, 0
    %67 = vmatprep.subr.mxu0 0.0
    %68 = vmatpush1.msra.mxu0 %v45
    %69 = vmatprep.subr.mxu0 0.0
    %70 = vmatpush1.msra.mxu0 %v46
    %71 = vmatprep.subr.mxu0 0.0
    %72 = vmatpush1.msra.mxu0 %v47
    %73 = vmatprep.subr.mxu0 0.0
    %74 = vmatpush1.msra.mxu0 %v48
    %75 = vmatprep.subr.mxu0 0.0
    %76 = vmatpush1.msra.mxu0 %v49
    %77 = vmatprep.subr.mxu0 0.0
    %78 = vmatpush1.msra.mxu0 %v50
    %79 = vmatprep.subr.mxu0 0.0
    %80 = vmatpush1.msra.mxu0 %v51
    %81 = vmatprep.subr.mxu0 0.0
    %82 = vmatpush1.msra.mxu0 %v52
    %83 = vmatprep.subr.mxu0 0.0
    %84 = vmatpush1.msra.mxu0 0.0
    %85 = vmatprep.subr.mxu0 0.0
    %86 = vmatpush1.msra.mxu0 0.0
    %87 = vmatprep.subr.mxu0 0.0
    %88 = vmatpush1.msra.mxu0 0.0
    %89 = vmatprep.subr.mxu0 0.0
    %90 = vmatpush1.msra.mxu0 0.0
    %91 = vmatprep.subr.mxu0 0.0
    %92 = vmatpush1.msra.mxu0 0.0
    %93 = vmatprep.subr.mxu0 0.0
    %94 = vmatpush1.msra.mxu0 0.0
    %95 = vmatprep.subr.mxu0 0.0
    %96 = vmatpush1.msra.mxu0 0.0
    %97 = vmatprep.subr.mxu0 0.0
    %98 = vmatpush1.msra.mxu0 0.0
    %99 = vmatprep.subr.mxu0 0.0
    %100 = vmatpush1.msra.mxu0 0.0
    %101 = vmatprep.subr.mxu0 0.0
    %102 = vmatpush1.msra.mxu0 0.0
    %103 = vmatprep.subr.mxu0 0.0
    %104 = vmatpush1.msra.mxu0 0.0
    %105 = vmatprep.subr.mxu0 0.0
    %106 = vmatpush1.msra.mxu0 0.0
    %107 = vmatprep.subr.mxu0 0.0
    %108 = vmatpush1.msra.mxu0 0.0
    %109 = vmatprep.subr.mxu0 0.0
    %110 = vmatpush1.msra.mxu0 0.0
    %111 = vmatprep.subr.mxu0 0.0
    %112 = vmatpush1.msra.mxu0 0.0
    %113 = vmatprep.subr.mxu0 0.0
    %114 = vmatpush1.msra.mxu0 0.0
    %115 = vmatprep.subr.mxu0 0.0
    %116 = vmatpush1.msra.mxu0 0.0
    %117 = vmatprep.subr.mxu0 0.0
    %118 = vmatpush1.msra.mxu0 0.0
    %119 = vmatprep.subr.mxu0 0.0
    %120 = vmatpush1.msra.mxu0 0.0
    %121 = vmatprep.subr.mxu0 0.0
    %122 = vmatpush1.msra.mxu0 0.0
    %123 = vmatprep.subr.mxu0 0.0
    %124 = vmatpush1.msra.mxu0 0.0
    %125 = vmatprep.subr.mxu0 0.0
    %126 = vmatpush1.msra.mxu0 0.0
    %127 = vmatprep.subr.mxu0 0.0
    %128 = vmatpush1.msra.mxu0 0.0
    %129 = vmatprep.subr.mxu0 0.0
    %130 = vmatpush1.msra.mxu0 0.0
    %131 = vmatprep.mubr.f32.mxu0 0.0
    %132 = vmatmul.mubr.f32.gmra.mrb[0].mxu0 %v62
    %v133 = vpop.f32.mrb[0].mxu0
    %v134 = vadd.f32 %v58, %v133
    %v135 = vpop.f32.mrb[0].mxu0
    %136 = vmatprep.mubr.f32.mxu0 0.0
    %137 = vmatmul.mubr.f32.gmra.mrb[0].mxu0 %v65
    %v138 = vpop.f32.mrb[0].mxu0
    %v139 = vadd.f32 %v58, %v138
    %v140 = vpop.f32.mrb[0].mxu0
    %141 = vdwg.mxu0
    %142 = vst [vmem:[#allocation7] sm:$0xff] %v134
    %143 = vst [vmem:[#allocation7 + $0x8] sm:$0xff] %v139
    // Predicated region
    $region22: #{linear_plus_one.1} parent=1 // pred_check
      _
    $region23: #{linear_plus_one.1} parent=1 // pred_check_branch
      %145 = sbr.rel (0) target = $region25
    $region24: #{linear_plus_one.1} parent=1 // pred_region
      %s147 = ssub.s32 256, 256
      %148 = vsyncadd [#allocation4], %s147
      %s149 = sshll.u32 [#allocation7], 4
      %s150 = int_to_ptr.vmem [resolvable:$true] %s149
      %155 = dma.vmem_to_hbm [thread:$0]  %s150, 256, %s3, [#allocation4], 128, 128, 8
    $region25: #{linear_plus_one.1} parent=1 // pred_fallthru
      _
    // Predicated region
    $region26: #{linear_plus_one.1} parent=1 // pred_check
      _
    $region27: #{linear_plus_one.1} parent=1 // pred_check_branch
      %157 = sbr.rel (0) target = $region29
    $region28: #{linear_plus_one.1} parent=1 // pred_region
      %158 = dma.done [#allocation4], 256
    $region29: #{linear_plus_one.1} parent=1 // pred_fallthru
      _
    %159 = vsyncpa [#allocation3], 1
    %160 = vsyncpa [#allocation6], 1
    %161 = vsyncpa [#allocation4], 1

</llo_original>
